<compile_context>
chip_gen: v7x
topology: tpu7x:2x2x1
jax: 0.10.0
libtpu: 0.0.40
codegen_flags: <defaults>
</compile_context>

<pallas_src>
import functools

import jax
import jax.numpy as jnp
from jax.experimental import pallas as pl
from jax.experimental.pallas import tpu as pltpu


def _round_up(x, m):
    return (x + m - 1) // m * m


def _choose_time_chunk(T, bb, hp, target_bytes=2 << 20):
    """Largest divisor of T whose bf16 gi chunk fits target_bytes; prefer >=2 chunks
    so the chunk DMA overlaps the recurrence."""
    per_step = bb * 3 * hp * 2  # bf16 bytes per time step
    best = 1
    for d in range(1, T + 1):
        if T % d == 0 and d * per_step <= target_bytes:
            best = d
    if best == T and T > 1:
        for d in range(T - 1, 0, -1):
            if T % d == 0:
                best = d
                break
    return best


def gru_chunk_kernel(gi_ref, h0_ref, whh_ref, bhn_ref, wout_ref, bout_ref,
                     out_ref, hn_ref, h_scratch,
                     *, time_chunk, hidden_pad, unroll):
    """One grid step = one (batch group, time chunk).

    gi_ref  : (Tc, Bb, 3*Hp) bf16  precomputed x_t @ W_ih^T + b_ih (+ b_hh r/z)
    h0_ref  : (Bb, Hp)        f32  initial hidden state (zero padded)
    whh_ref : (Hp, 3*Hp)      bf16 W_hh^T (zero padded)
    bhn_ref : (1, Hp)         f32  n-gate b_hh (must stay inside r * (...))
    wout_ref: (Hp, Op)        bf16 final Linear weight, transposed
    bout_ref: (1, Op)         f32  final Linear bias
    out_ref : (Bb, Op)        f32  Linear(output_seq[-1])
    hn_ref  : (Bb, Hp)        f32  h_n
    h_scratch: (Bb, Hp)       f32  hidden state carried across time chunks
    """
    Hp = hidden_pad
    t_blk = pl.program_id(1)

    @pl.when(t_blk == 0)
    def _():
        h_scratch[...] = h0_ref[...]

    def step(i, h):
        gi = gi_ref[i].astype(jnp.float32)                                 # (Bb, 3Hp)
        gh = jnp.dot(h.astype(jnp.bfloat16), whh_ref[...],
                     preferred_element_type=jnp.float32)                   # (Bb, 3Hp)
        # Gate slices are 128-lane aligned (Hp is a multiple of 128).
        r = jax.nn.sigmoid(gi[:, :Hp] + gh[:, :Hp])
        z = jax.nn.sigmoid(gi[:, Hp:2 * Hp] + gh[:, Hp:2 * Hp])
        n = jnp.tanh(gi[:, 2 * Hp:] + r * (gh[:, 2 * Hp:] + bhn_ref[...]))
        return (1.0 - z) * n + z * h

    h_last = jax.lax.fori_loop(0, time_chunk, step, h_scratch[...], unroll=unroll)
    h_scratch[...] = h_last

    @pl.when(t_blk == pl.num_programs(1) - 1)
    def _():
        hn_ref[...] = h_last
        out_ref[...] = (jnp.dot(h_last.astype(jnp.bfloat16), wout_ref[...],
                                preferred_element_type=jnp.float32)
                        + bout_ref[...])


def rnn_forward(x, h0, params):
    """x: (T, B, I) f32; h0: (1, B, H) f32. Returns (output (B, O), h_n (1, B, H))."""
    T, B, I = x.shape
    H = h0.shape[-1]
    w_ih, w_hh, b_ih, b_hh, w_out, b_out = params
    O = w_out.shape[0]

    f32, bf16 = jnp.float32, jnp.bfloat16
    Bp = _round_up(B, 8)
    Hp = _round_up(H, 128)
    Op = _round_up(O, 128)

    # Batch groups: >=2 groups (when padded batch allows) so the "parallel" batch
    # axis can be sharded across TensorCores on v7x; harmless on v5e/v6e.
    bb = Bp // 2 if (Bp >= 16 and Bp % 16 == 0) else Bp
    nb = Bp // bb

    # --- Hoisted input-to-hidden matmul, emitted directly in padded layout.
    # Padded hidden units get zero weights/biases so they stay exactly 0 through
    # the recurrence; real lanes are identical to the unpadded math.
    x_p = jnp.pad(x.astype(f32), ((0, 0), (0, Bp - B), (0, 0)))           # (T, Bp, I)
    w_ih_p = (jnp.zeros((3, Hp, I), f32)
              .at[:, :H, :].set(w_ih.reshape(3, H, I)))
    b_fold = b_ih.reshape(3, H).at[:2].add(b_hh[:2 * H].reshape(2, H))    # fold r/z b_hh
    b_fold_p = jnp.zeros((3, Hp), f32).at[:, :H].set(b_fold)
    gi = (jnp.dot(x_p, w_ih_p.reshape(3 * Hp, I).T, preferred_element_type=f32)
          + b_fold_p.reshape(1, 1, 3 * Hp)).astype(bf16)                  # (T, Bp, 3Hp)

    # --- Recurrent / output weights, zero padded.
    w_hh_p = (jnp.zeros((Hp, 3, Hp), f32)
              .at[:H, :, :H].set(w_hh.T.reshape(H, 3, H))
              .reshape(Hp, 3 * Hp).astype(bf16))
    b_hn_p = jnp.zeros((1, Hp), f32).at[0, :H].set(b_hh[2 * H:])
    h0_p = jnp.zeros((Bp, Hp), f32).at[:B, :H].set(h0[0])
    w_out_p = jnp.zeros((Hp, Op), f32).at[:H, :O].set(w_out.T).astype(bf16)
    b_out_p = jnp.zeros((1, Op), f32).at[0, :O].set(b_out)

    tc = _choose_time_chunk(T, bb, Hp)
    nt = T // tc
    unroll = min(tc, 4)

    kernel = functools.partial(gru_chunk_kernel, time_chunk=tc, hidden_pad=Hp,
                               unroll=unroll)

    # Explicit VMEM budget: weights (single copy) + double-buffered gi chunk + small.
    vmem_bytes = (2 * tc * bb * 3 * Hp * 2          # gi chunk, double-buffered, bf16
                  + Hp * 3 * Hp * 2 + Hp * Op * 2   # W_hh^T, W_out^T (bf16)
                  + 2 * bb * Hp * 4                 # h0 block
                  + (Hp + Op) * 4                   # biases
                  + 2 * (bb * Op + bb * Hp) * 4     # outputs
                  + bb * Hp * 4)                    # h scratch
    vmem_limit = int(min(max(2 * vmem_bytes, 8 << 20), 64 << 20))

    grid_spec = pltpu.PrefetchScalarGridSpec(
        num_scalar_prefetch=0,
        grid=(nb, nt),
        in_specs=[
            pl.BlockSpec((tc, bb, 3 * Hp), lambda b, t: (t, b, 0)),   # gi
            pl.BlockSpec((bb, Hp), lambda b, t: (b, 0)),              # h0
            pl.BlockSpec((Hp, 3 * Hp), lambda b, t: (0, 0)),          # W_hh^T
            pl.BlockSpec((1, Hp), lambda b, t: (0, 0)),               # b_hn
            pl.BlockSpec((Hp, Op), lambda b, t: (0, 0)),              # W_out^T
            pl.BlockSpec((1, Op), lambda b, t: (0, 0)),               # b_out
        ],
        out_specs=[
            pl.BlockSpec((bb, Op), lambda b, t: (b, 0)),              # Linear(out[-1])
            pl.BlockSpec((bb, Hp), lambda b, t: (b, 0)),              # h_n
        ],
        scratch_shapes=[pltpu.VMEM((bb, Hp), f32)],
    )

    out_p, hn_p = pl.pallas_call(
        kernel,
        grid_spec=grid_spec,
        out_shape=(jax.ShapeDtypeStruct((Bp, Op), f32),
                   jax.ShapeDtypeStruct((Bp, Hp), f32)),
        compiler_params=pltpu.CompilerParams(
            dimension_semantics=("parallel", "arbitrary"),
            vmem_limit_bytes=vmem_limit),
    )(gi, h0_p, w_hh_p, b_hn_p, w_out_p, b_out_p)

    out = out_p[:B, :O]
    h_n = hn_p[:B, :H][None]                       # (1, B, H)
    return out, h_n


def _reference_gru(x, h0, params):
    """Pure-JAX f32 reference matching PyTorch nn.GRU + nn.Linear semantics."""
    w_ih, w_hh, b_ih, b_hh, w_out, b_out = params
    H = h0.shape[-1]

    def step(h, x_t):
        gi = x_t @ w_ih.T + b_ih
        gh = h @ w_hh.T + b_hh
        i_r, i_z, i_n = gi[:, :H], gi[:, H:2 * H], gi[:, 2 * H:]
        h_r, h_z, h_n = gh[:, :H], gh[:, H:2 * H], gh[:, 2 * H:]
        r = jax.nn.sigmoid(i_r + h_r)
        z = jax.nn.sigmoid(i_z + h_z)
        n = jnp.tanh(i_n + r * h_n)
        h_new = (1.0 - z) * n + z * h
        return h_new, h_new

    h_last, _ = jax.lax.scan(step, h0[0], x)
    out = h_last @ w_out.T + b_out
    return out, h_last[None]


if __name__ == "__main__":
    # Small shapes consistent with the module's forward (seq, batch, feature).
    T, B, I, H, O = 8, 4, 16, 32, 8

    key = jax.random.PRNGKey(0)
    ks = jax.random.split(key, 8)
    s = 1.0 / jnp.sqrt(H)   # PyTorch-style uniform init range
    w_ih = jax.random.uniform(ks[0], (3 * H, I), jnp.float32, -s, s)
    w_hh = jax.random.uniform(ks[1], (3 * H, H), jnp.float32, -s, s)
    b_ih = jax.random.uniform(ks[2], (3 * H,), jnp.float32, -s, s)
    b_hh = jax.random.uniform(ks[3], (3 * H,), jnp.float32, -s, s)
    w_out = jax.random.uniform(ks[4], (O, H), jnp.float32, -s, s)
    b_out = jax.random.uniform(ks[5], (O,), jnp.float32, -s, s)
    params = (w_ih, w_hh, b_ih, b_hh, w_out, b_out)

    x = jax.random.normal(ks[6], (T, B, I), jnp.float32)    # (seq, batch, input)
    h0 = jax.random.normal(ks[7], (1, B, H), jnp.float32)   # (layers, batch, hidden)

    out, h_n = jax.jit(rnn_forward)(x, h0, params)
    jax.block_until_ready((out, h_n))

    ref_out, ref_hn = _reference_gru(x, h0, params)
    # bf16 MXU operands with f32 accumulation: tolerance relaxed vs. pure f32.
    assert jnp.allclose(out, ref_out, atol=3e-2, rtol=3e-2), "output mismatch"
    assert jnp.allclose(h_n, ref_hn, atol=3e-2, rtol=3e-2), "h_n mismatch"

    print("KERNEL_OK")
</pallas_src>

<mosaic_0001>
module attributes {stable_mosaic.version = 11 : i64} {
  func.func @gru_chunk_kernel(%arg0: i32, %arg1: i32, %arg2: memref<4x8x384xbf16, #tpu.memory_space<vmem>>, %arg3: memref<8x128xf32, #tpu.memory_space<vmem>>, %arg4: memref<128x384xbf16, #tpu.memory_space<vmem>>, %arg5: memref<1x128xf32, #tpu.memory_space<vmem>>, %arg6: memref<128x128xbf16, #tpu.memory_space<vmem>>, %arg7: memref<1x128xf32, #tpu.memory_space<vmem>>, %arg8: memref<8x128xf32, #tpu.memory_space<vmem>>, %arg9: memref<8x128xf32, #tpu.memory_space<vmem>>, %arg10: memref<8x128xf32, #tpu.memory_space<vmem>>) attributes {dimension_semantics = [#tpu.dimension_semantics<parallel>, #tpu.dimension_semantics<arbitrary>], iteration_bounds = array<i64: 1, 2>, scalar_prefetch = 0 : i64, scratch_operands = 1 : i64, tpu.core_type = #tpu.core_type<tc>, window_params = [{transform_indices = @transform_0, window_bounds = array<i64: 4, 8, 384>}, {transform_indices = @transform_1, window_bounds = array<i64: 8, 128>}, {pipeline_mode = #tpu.pipeline_mode<synchronous>, transform_indices = @transform_2, window_bounds = array<i64: 128, 384>}, {pipeline_mode = #tpu.pipeline_mode<synchronous>, transform_indices = @transform_3, window_bounds = array<i64: 1, 128>}, {pipeline_mode = #tpu.pipeline_mode<synchronous>, transform_indices = @transform_4, window_bounds = array<i64: 128, 128>}, {pipeline_mode = #tpu.pipeline_mode<synchronous>, transform_indices = @transform_5, window_bounds = array<i64: 1, 128>}, {transform_indices = @transform_6, window_bounds = array<i64: 8, 128>}, {transform_indices = @transform_7, window_bounds = array<i64: 8, 128>}]} {
    %c0_i32 = arith.constant 0 : i32
    %0 = arith.cmpi eq, %arg1, %c0_i32 : i32
    %1 = arith.extui %0 : i1 to i32
    %c0_i32_0 = arith.constant 0 : i32
    %2 = arith.cmpi ne, %1, %c0_i32_0 : i32
    scf.if %2 {
      %c0_46 = arith.constant 0 : index
      %c0_47 = arith.constant 0 : index
      %152 = vector.load %arg3[%c0_46, %c0_47] : memref<8x128xf32, #tpu.memory_space<vmem>>, vector<8x128xf32>
      %c0_48 = arith.constant 0 : index
      %c0_49 = arith.constant 0 : index
      %153 = vector.load %arg10[%c0_48, %c0_49] : memref<8x128xf32, #tpu.memory_space<vmem>>, vector<8x128xf32>
      tpu.vector_store %arg10[%c0_48, %c0_49], %152 {strides = array<i32>} : memref<8x128xf32, #tpu.memory_space<vmem>>, vector<8x128xf32>,
    } else {
    }
    %c0 = arith.constant 0 : index
    %c0_1 = arith.constant 0 : index
    %3 = vector.load %arg10[%c0, %c0_1] : memref<8x128xf32, #tpu.memory_space<vmem>>, vector<8x128xf32>
    %c0_i32_2 = arith.constant 0 : i32
    %4 = arith.index_cast %c0_i32_2 : i32 to index
    %c0_3 = arith.constant 0 : index
    %c0_4 = arith.constant 0 : index
    %5 = vector.load %arg2[%4, %c0_3, %c0_4] : memref<4x8x384xbf16, #tpu.memory_space<vmem>>, vector<1x8x384xbf16>
    %6 = vector.shape_cast %5 : vector<1x8x384xbf16> to vector<8x384xbf16>
    %7 = arith.extf %6 : vector<8x384xbf16> to vector<8x384xf32>
    %8 = arith.truncf %3 : vector<8x128xf32> to vector<8x128xbf16>
    %c0_5 = arith.constant 0 : index
    %c0_6 = arith.constant 0 : index
    %9 = vector.load %arg4[%c0_5, %c0_6] : memref<128x384xbf16, #tpu.memory_space<vmem>>, vector<128x384xbf16>
    %cst = arith.constant dense<0.000000e+00> : vector<8x384xf32>
    %10 = tpu.matmul %8, %9, %cst {dimension_numbers = #tpu.dot_dimension_numbers<[1], [0], [0], [1], [0, 0, 1, 1], [], []>} : vector<8x128xbf16>, vector<128x384xbf16>, vector<8x384xf32> -> vector<8x384xf32>
    %11 = vector.extract_strided_slice %7 {offsets = [0, 0], sizes = [8, 128], strides = [1, 1]} : vector<8x384xf32> to vector<8x128xf32>
    %12 = vector.extract_strided_slice %10 {offsets = [0, 0], sizes = [8, 128], strides = [1, 1]} : vector<8x384xf32> to vector<8x128xf32>
    %13 = arith.addf %11, %12 : vector<8x128xf32>
    %14 = arith.negf %13 : vector<8x128xf32>
    %15 = math.exp %14 : vector<8x128xf32>
    %cst_7 = arith.constant 1.000000e+00 : f32
    %16 = vector.broadcast %cst_7 : f32 to vector<8x128xf32>
    %17 = arith.addf %16, %15 : vector<8x128xf32>
    %18 = arith.divf %16, %17 : vector<8x128xf32>
    %19 = vector.extract_strided_slice %7 {offsets = [0, 128], sizes = [8, 128], strides = [1, 1]} : vector<8x384xf32> to vector<8x128xf32>
    %20 = vector.extract_strided_slice %10 {offsets = [0, 128], sizes = [8, 128], strides = [1, 1]} : vector<8x384xf32> to vector<8x128xf32>
    %21 = arith.addf %19, %20 : vector<8x128xf32>
    %22 = arith.negf %21 : vector<8x128xf32>
    %23 = math.exp %22 : vector<8x128xf32>
    %cst_8 = arith.constant 1.000000e+00 : f32
    %24 = vector.broadcast %cst_8 : f32 to vector<8x128xf32>
    %25 = arith.addf %24, %23 : vector<8x128xf32>
    %26 = arith.divf %24, %25 : vector<8x128xf32>
    %27 = vector.extract_strided_slice %7 {offsets = [0, 256], sizes = [8, 128], strides = [1, 1]} : vector<8x384xf32> to vector<8x128xf32>
    %28 = vector.extract_strided_slice %10 {offsets = [0, 256], sizes = [8, 128], strides = [1, 1]} : vector<8x384xf32> to vector<8x128xf32>
    %c0_9 = arith.constant 0 : index
    %c0_10 = arith.constant 0 : index
    %29 = vector.load %arg5[%c0_9, %c0_10] : memref<1x128xf32, #tpu.memory_space<vmem>>, vector<1x128xf32>
    %30 = vector.broadcast %29 : vector<1x128xf32> to vector<8x128xf32>
    %31 = arith.addf %28, %30 : vector<8x128xf32>
    %32 = arith.mulf %18, %31 : vector<8x128xf32>
    %33 = arith.addf %27, %32 : vector<8x128xf32>
    %34 = math.tanh %33 : vector<8x128xf32>
    %cst_11 = arith.constant 1.000000e+00 : f32
    %35 = vector.broadcast %cst_11 : f32 to vector<8x128xf32>
    %36 = arith.subf %35, %26 : vector<8x128xf32>
    %37 = arith.mulf %36, %34 : vector<8x128xf32>
    %38 = arith.mulf %26, %3 : vector<8x128xf32>
    %39 = arith.addf %37, %38 : vector<8x128xf32>
    %c1_i32 = arith.constant 1 : i32
    %40 = arith.index_cast %c1_i32 : i32 to index
    %c0_12 = arith.constant 0 : index
    %c0_13 = arith.constant 0 : index
    %41 = vector.load %arg2[%40, %c0_12, %c0_13] : memref<4x8x384xbf16, #tpu.memory_space<vmem>>, vector<1x8x384xbf16>
    %42 = vector.shape_cast %41 : vector<1x8x384xbf16> to vector<8x384xbf16>
    %43 = arith.extf %42 : vector<8x384xbf16> to vector<8x384xf32>
    %44 = arith.truncf %39 : vector<8x128xf32> to vector<8x128xbf16>
    %c0_14 = arith.constant 0 : index
    %c0_15 = arith.constant 0 : index
    %45 = vector.load %arg4[%c0_14, %c0_15] : memref<128x384xbf16, #tpu.memory_space<vmem>>, vector<128x384xbf16>
    %cst_16 = arith.constant dense<0.000000e+00> : vector<8x384xf32>
    %46 = tpu.matmul %44, %45, %cst_16 {dimension_numbers = #tpu.dot_dimension_numbers<[1], [0], [0], [1], [0, 0, 1, 1], [], []>} : vector<8x128xbf16>, vector<128x384xbf16>, vector<8x384xf32> -> vector<8x384xf32>
    %47 = vector.extract_strided_slice %43 {offsets = [0, 0], sizes = [8, 128], strides = [1, 1]} : vector<8x384xf32> to vector<8x128xf32>
    %48 = vector.extract_strided_slice %46 {offsets = [0, 0], sizes = [8, 128], strides = [1, 1]} : vector<8x384xf32> to vector<8x128xf32>
    %49 = arith.addf %47, %48 : vector<8x128xf32>
    %50 = arith.negf %49 : vector<8x128xf32>
    %51 = math.exp %50 : vector<8x128xf32>
    %cst_17 = arith.constant 1.000000e+00 : f32
    %52 = vector.broadcast %cst_17 : f32 to vector<8x128xf32>
    %53 = arith.addf %52, %51 : vector<8x128xf32>
    %54 = arith.divf %52, %53 : vector<8x128xf32>
    %55 = vector.extract_strided_slice %43 {offsets = [0, 128], sizes = [8, 128], strides = [1, 1]} : vector<8x384xf32> to vector<8x128xf32>
    %56 = vector.extract_strided_slice %46 {offsets = [0, 128], sizes = [8, 128], strides = [1, 1]} : vector<8x384xf32> to vector<8x128xf32>
    %57 = arith.addf %55, %56 : vector<8x128xf32>
    %58 = arith.negf %57 : vector<8x128xf32>
    %59 = math.exp %58 : vector<8x128xf32>
    %cst_18 = arith.constant 1.000000e+00 : f32
    %60 = vector.broadcast %cst_18 : f32 to vector<8x128xf32>
    %61 = arith.addf %60, %59 : vector<8x128xf32>
    %62 = arith.divf %60, %61 : vector<8x128xf32>
    %63 = vector.extract_strided_slice %43 {offsets = [0, 256], sizes = [8, 128], strides = [1, 1]} : vector<8x384xf32> to vector<8x128xf32>
    %64 = vector.extract_strided_slice %46 {offsets = [0, 256], sizes = [8, 128], strides = [1, 1]} : vector<8x384xf32> to vector<8x128xf32>
    %c0_19 = arith.constant 0 : index
    %c0_20 = arith.constant 0 : index
    %65 = vector.load %arg5[%c0_19, %c0_20] : memref<1x128xf32, #tpu.memory_space<vmem>>, vector<1x128xf32>
    %66 = vector.broadcast %65 : vector<1x128xf32> to vector<8x128xf32>
    %67 = arith.addf %64, %66 : vector<8x128xf32>
    %68 = arith.mulf %54, %67 : vector<8x128xf32>
    %69 = arith.addf %63, %68 : vector<8x128xf32>
    %70 = math.tanh %69 : vector<8x128xf32>
    %cst_21 = arith.constant 1.000000e+00 : f32
    %71 = vector.broadcast %cst_21 : f32 to vector<8x128xf32>
    %72 = arith.subf %71, %62 : vector<8x128xf32>
    %73 = arith.mulf %72, %70 : vector<8x128xf32>
    %74 = arith.mulf %62, %39 : vector<8x128xf32>
    %75 = arith.addf %73, %74 : vector<8x128xf32>
    %c2_i32 = arith.constant 2 : i32
    %76 = arith.index_cast %c2_i32 : i32 to index
    %c0_22 = arith.constant 0 : index
    %c0_23 = arith.constant 0 : index
    %77 = vector.load %arg2[%76, %c0_22, %c0_23] : memref<4x8x384xbf16, #tpu.memory_space<vmem>>, vector<1x8x384xbf16>
    %78 = vector.shape_cast %77 : vector<1x8x384xbf16> to vector<8x384xbf16>
    %79 = arith.extf %78 : vector<8x384xbf16> to vector<8x384xf32>
    %80 = arith.truncf %75 : vector<8x128xf32> to vector<8x128xbf16>
    %c0_24 = arith.constant 0 : index
    %c0_25 = arith.constant 0 : index
    %81 = vector.load %arg4[%c0_24, %c0_25] : memref<128x384xbf16, #tpu.memory_space<vmem>>, vector<128x384xbf16>
    %cst_26 = arith.constant dense<0.000000e+00> : vector<8x384xf32>
    %82 = tpu.matmul %80, %81, %cst_26 {dimension_numbers = #tpu.dot_dimension_numbers<[1], [0], [0], [1], [0, 0, 1, 1], [], []>} : vector<8x128xbf16>, vector<128x384xbf16>, vector<8x384xf32> -> vector<8x384xf32>
    %83 = vector.extract_strided_slice %79 {offsets = [0, 0], sizes = [8, 128], strides = [1, 1]} : vector<8x384xf32> to vector<8x128xf32>
    %84 = vector.extract_strided_slice %82 {offsets = [0, 0], sizes = [8, 128], strides = [1, 1]} : vector<8x384xf32> to vector<8x128xf32>
    %85 = arith.addf %83, %84 : vector<8x128xf32>
    %86 = arith.negf %85 : vector<8x128xf32>
    %87 = math.exp %86 : vector<8x128xf32>
    %cst_27 = arith.constant 1.000000e+00 : f32
    %88 = vector.broadcast %cst_27 : f32 to vector<8x128xf32>
    %89 = arith.addf %88, %87 : vector<8x128xf32>
    %90 = arith.divf %88, %89 : vector<8x128xf32>
    %91 = vector.extract_strided_slice %79 {offsets = [0, 128], sizes = [8, 128], strides = [1, 1]} : vector<8x384xf32> to vector<8x128xf32>
    %92 = vector.extract_strided_slice %82 {offsets = [0, 128], sizes = [8, 128], strides = [1, 1]} : vector<8x384xf32> to vector<8x128xf32>
    %93 = arith.addf %91, %92 : vector<8x128xf32>
    %94 = arith.negf %93 : vector<8x128xf32>
    %95 = math.exp %94 : vector<8x128xf32>
    %cst_28 = arith.constant 1.000000e+00 : f32
    %96 = vector.broadcast %cst_28 : f32 to vector<8x128xf32>
    %97 = arith.addf %96, %95 : vector<8x128xf32>
    %98 = arith.divf %96, %97 : vector<8x128xf32>
    %99 = vector.extract_strided_slice %79 {offsets = [0, 256], sizes = [8, 128], strides = [1, 1]} : vector<8x384xf32> to vector<8x128xf32>
    %100 = vector.extract_strided_slice %82 {offsets = [0, 256], sizes = [8, 128], strides = [1, 1]} : vector<8x384xf32> to vector<8x128xf32>
    %c0_29 = arith.constant 0 : index
    %c0_30 = arith.constant 0 : index
    %101 = vector.load %arg5[%c0_29, %c0_30] : memref<1x128xf32, #tpu.memory_space<vmem>>, vector<1x128xf32>
    %102 = vector.broadcast %101 : vector<1x128xf32> to vector<8x128xf32>
    %103 = arith.addf %100, %102 : vector<8x128xf32>
    %104 = arith.mulf %90, %103 : vector<8x128xf32>
    %105 = arith.addf %99, %104 : vector<8x128xf32>
    %106 = math.tanh %105 : vector<8x128xf32>
    %cst_31 = arith.constant 1.000000e+00 : f32
    %107 = vector.broadcast %cst_31 : f32 to vector<8x128xf32>
    %108 = arith.subf %107, %98 : vector<8x128xf32>
    %109 = arith.mulf %108, %106 : vector<8x128xf32>
    %110 = arith.mulf %98, %75 : vector<8x128xf32>
    %111 = arith.addf %109, %110 : vector<8x128xf32>
    %c3_i32 = arith.constant 3 : i32
    %112 = arith.index_cast %c3_i32 : i32 to index
    %c0_32 = arith.constant 0 : index
    %c0_33 = arith.constant 0 : index
    %113 = vector.load %arg2[%112, %c0_32, %c0_33] : memref<4x8x384xbf16, #tpu.memory_space<vmem>>, vector<1x8x384xbf16>
    %114 = vector.shape_cast %113 : vector<1x8x384xbf16> to vector<8x384xbf16>
    %115 = arith.extf %114 : vector<8x384xbf16> to vector<8x384xf32>
    %116 = arith.truncf %111 : vector<8x128xf32> to vector<8x128xbf16>
    %c0_34 = arith.constant 0 : index
    %c0_35 = arith.constant 0 : index
    %117 = vector.load %arg4[%c0_34, %c0_35] : memref<128x384xbf16, #tpu.memory_space<vmem>>, vector<128x384xbf16>
    %cst_36 = arith.constant dense<0.000000e+00> : vector<8x384xf32>
    %118 = tpu.matmul %116, %117, %cst_36 {dimension_numbers = #tpu.dot_dimension_numbers<[1], [0], [0], [1], [0, 0, 1, 1], [], []>} : vector<8x128xbf16>, vector<128x384xbf16>, vector<8x384xf32> -> vector<8x384xf32>
    %119 = vector.extract_strided_slice %115 {offsets = [0, 0], sizes = [8, 128], strides = [1, 1]} : vector<8x384xf32> to vector<8x128xf32>
    %120 = vector.extract_strided_slice %118 {offsets = [0, 0], sizes = [8, 128], strides = [1, 1]} : vector<8x384xf32> to vector<8x128xf32>
    %121 = arith.addf %119, %120 : vector<8x128xf32>
    %122 = arith.negf %121 : vector<8x128xf32>
    %123 = math.exp %122 : vector<8x128xf32>
    %cst_37 = arith.constant 1.000000e+00 : f32
    %124 = vector.broadcast %cst_37 : f32 to vector<8x128xf32>
    %125 = arith.addf %124, %123 : vector<8x128xf32>
    %126 = arith.divf %124, %125 : vector<8x128xf32>
    %127 = vector.extract_strided_slice %115 {offsets = [0, 128], sizes = [8, 128], strides = [1, 1]} : vector<8x384xf32> to vector<8x128xf32>
    %128 = vector.extract_strided_slice %118 {offsets = [0, 128], sizes = [8, 128], strides = [1, 1]} : vector<8x384xf32> to vector<8x128xf32>
    %129 = arith.addf %127, %128 : vector<8x128xf32>
    %130 = arith.negf %129 : vector<8x128xf32>
    %131 = math.exp %130 : vector<8x128xf32>
    %cst_38 = arith.constant 1.000000e+00 : f32
    %132 = vector.broadcast %cst_38 : f32 to vector<8x128xf32>
    %133 = arith.addf %132, %131 : vector<8x128xf32>
    %134 = arith.divf %132, %133 : vector<8x128xf32>
    %135 = vector.extract_strided_slice %115 {offsets = [0, 256], sizes = [8, 128], strides = [1, 1]} : vector<8x384xf32> to vector<8x128xf32>
    %136 = vector.extract_strided_slice %118 {offsets = [0, 256], sizes = [8, 128], strides = [1, 1]} : vector<8x384xf32> to vector<8x128xf32>
    %c0_39 = arith.constant 0 : index
    %c0_40 = arith.constant 0 : index
    %137 = vector.load %arg5[%c0_39, %c0_40] : memref<1x128xf32, #tpu.memory_space<vmem>>, vector<1x128xf32>
    %138 = vector.broadcast %137 : vector<1x128xf32> to vector<8x128xf32>
    %139 = arith.addf %136, %138 : vector<8x128xf32>
    %140 = arith.mulf %126, %139 : vector<8x128xf32>
    %141 = arith.addf %135, %140 : vector<8x128xf32>
    %142 = math.tanh %141 : vector<8x128xf32>
    %cst_41 = arith.constant 1.000000e+00 : f32
    %143 = vector.broadcast %cst_41 : f32 to vector<8x128xf32>
    %144 = arith.subf %143, %134 : vector<8x128xf32>
    %145 = arith.mulf %144, %142 : vector<8x128xf32>
    %146 = arith.mulf %134, %111 : vector<8x128xf32>
    %147 = arith.addf %145, %146 : vector<8x128xf32>
    %c4_i32 = arith.constant 4 : i32
    %c0_42 = arith.constant 0 : index
    %c0_43 = arith.constant 0 : index
    %148 = vector.load %arg10[%c0_42, %c0_43] : memref<8x128xf32, #tpu.memory_space<vmem>>, vector<8x128xf32>
    tpu.vector_store %arg10[%c0_42, %c0_43], %147 {strides = array<i32>} : memref<8x128xf32, #tpu.memory_space<vmem>>, vector<8x128xf32>,
    %c1_i32_44 = arith.constant 1 : i32
    %149 = arith.cmpi eq, %arg1, %c1_i32_44 : i32
    %150 = arith.extui %149 : i1 to i32
    %c0_i32_45 = arith.constant 0 : i32
    %151 = arith.cmpi ne, %150, %c0_i32_45 : i32
    scf.if %151 {
      %c0_46 = arith.constant 0 : index
      %c0_47 = arith.constant 0 : index
      %152 = vector.load %arg9[%c0_46, %c0_47] : memref<8x128xf32, #tpu.memory_space<vmem>>, vector<8x128xf32>
      tpu.vector_store %arg9[%c0_46, %c0_47], %147 {strides = array<i32>} : memref<8x128xf32, #tpu.memory_space<vmem>>, vector<8x128xf32>,
      %153 = arith.truncf %147 : vector<8x128xf32> to vector<8x128xbf16>
      %c0_48 = arith.constant 0 : index
      %c0_49 = arith.constant 0 : index
      %154 = vector.load %arg6[%c0_48, %c0_49] : memref<128x128xbf16, #tpu.memory_space<vmem>>, vector<128x128xbf16>
      %cst_50 = arith.constant dense<0.000000e+00> : vector<8x128xf32>
      %155 = tpu.matmul %153, %154, %cst_50 {dimension_numbers = #tpu.dot_dimension_numbers<[1], [0], [0], [1], [0, 0, 1, 1], [], []>} : vector<8x128xbf16>, vector<128x128xbf16>, vector<8x128xf32> -> vector<8x128xf32>
      %c0_51 = arith.constant 0 : index
      %c0_52 = arith.constant 0 : index
      %156 = vector.load %arg7[%c0_51, %c0_52] : memref<1x128xf32, #tpu.memory_space<vmem>>, vector<1x128xf32>
      %157 = vector.broadcast %156 : vector<1x128xf32> to vector<8x128xf32>
      %158 = arith.addf %155, %157 : vector<8x128xf32>
      %c0_53 = arith.constant 0 : index
      %c0_54 = arith.constant 0 : index
      %159 = vector.load %arg8[%c0_53, %c0_54] : memref<8x128xf32, #tpu.memory_space<vmem>>, vector<8x128xf32>
      tpu.vector_store %arg8[%c0_53, %c0_54], %158 {strides = array<i32>} : memref<8x128xf32, #tpu.memory_space<vmem>>, vector<8x128xf32>,
    } else {
    }
    return
  }
  func.func @transform_0(%arg0: i32, %arg1: i32) -> (i32, i32, i32) {
    %c0_i32 = arith.constant 0 : i32
    %c0_i32_0 = arith.constant 0 : i32
    return %arg1, %arg0, %c0_i32 : i32, i32, i32
  }
  func.func @transform_1(%arg0: i32, %arg1: i32) -> (i32, i32) {
    %c0_i32 = arith.constant 0 : i32
    %c0_i32_0 = arith.constant 0 : i32
    return %arg0, %c0_i32 : i32, i32
  }
  func.func @transform_2(%arg0: i32, %arg1: i32) -> (i32, i32) {
    %c0_i32 = arith.constant 0 : i32
    %c0_i32_0 = arith.constant 0 : i32
    %c0_i32_1 = arith.constant 0 : i32
    return %c0_i32, %c0_i32_0 : i32, i32
  }
  func.func @transform_3(%arg0: i32, %arg1: i32) -> (i32, i32) {
    %c0_i32 = arith.constant 0 : i32
    %c0_i32_0 = arith.constant 0 : i32
    %c0_i32_1 = arith.constant 0 : i32
    return %c0_i32, %c0_i32_0 : i32, i32
  }
  func.func @transform_4(%arg0: i32, %arg1: i32) -> (i32, i32) {
    %c0_i32 = arith.constant 0 : i32
    %c0_i32_0 = arith.constant 0 : i32
    %c0_i32_1 = arith.constant 0 : i32
    return %c0_i32, %c0_i32_0 : i32, i32
  }
  func.func @transform_5(%arg0: i32, %arg1: i32) -> (i32, i32) {
    %c0_i32 = arith.constant 0 : i32
    %c0_i32_0 = arith.constant 0 : i32
    %c0_i32_1 = arith.constant 0 : i32
    return %c0_i32, %c0_i32_0 : i32, i32
  }
  func.func @transform_6(%arg0: i32, %arg1: i32) -> (i32, i32) {
    %c0_i32 = arith.constant 0 : i32
    %c0_i32_0 = arith.constant 0 : i32
    return %arg0, %c0_i32 : i32, i32
  }
  func.func @transform_7(%arg0: i32, %arg1: i32) -> (i32, i32) {
    %c0_i32 = arith.constant 0 : i32
    %c0_i32_0 = arith.constant 0 : i32
    return %arg0, %c0_i32 : i32, i32
  }
}

</mosaic_0001>

<llo_original>
// kernel: rnn_forward.1
$region0: #{rnn_forward.1}
  #allocation0 [shape = 'u32[]', space=smem, size = 0x4, offset = 0x4, fixed_abs, tag = 'smem constant byte address 0x4 - core index']
  #allocation1 [shape = 'u32[144,128]{1,0:T(1,128)}', space=vmem, size = 0x12000, scoped, tag = 'internal scratch']
  #allocation2 [shape = 'f32[8,128]{1,0:T(8,128)}', space=vmem, size = 0x1000, scoped, tag = 'scratch operand']
  %s0 = inlined_call_operand.vmem [shape: bf16[8,8,384], index: 0, kind: input, shape index: {}]
  %s1 = inlined_call_operand.vmem [shape: f32[8,128], index: 1, kind: input, shape index: {}]
  %s2 = inlined_call_operand.vmem [shape: bf16[128,384], index: 2, kind: input, shape index: {}]
  %s3 = inlined_call_operand.vmem [shape: f32[1,128], index: 3, kind: input, shape index: {}]
  %s4 = inlined_call_operand.vmem [shape: bf16[128,128], index: 4, kind: input, shape index: {}]
  %s5 = inlined_call_operand.vmem [shape: f32[1,128], index: 5, kind: input, shape index: {}]
  %s6 = inlined_call_operand.vmem [shape: f32[8,128], index: 6, kind: output, shape index: {0}]
  %s7 = inlined_call_operand.vmem [shape: f32[8,128], index: 7, kind: output, shape index: {1}]
  %8 = xla_tuple %s6, %s7
  %s9 = sld [smem:[#allocation0]]
  $region73: #{rnn_forward.1} parent=0
    _
  %s11 = ssub.s32 1, %s9
  %s12 = scalar_select 0, %s11, %s9
  loop: start=0, step=1, limit=4
  $region2: #{rnn_forward.1} parent=0 // loop_pre_header
    _
  $region3: #{rnn_forward.1} parent=0 // loop_header
    %s14 = sphi 0, %s18
    %p15 = scmp.ge.s32.totalorder %s14, 4
    %s21 = sphi 0, %s33
    %s22 = sphi 0, %s29
    %s23 = sphi 0, %s21
    %s24 = sphi 0, %s22
    %s25 = sphi 0, %s23
    %s26 = sphi 0, %s24
    %s38 = sphi 0, %s40
    %s41 = sphi 0, %s38
    %s42 = sphi 0, %s41
    %s58 = sphi 0, %s42
    %s64 = sphi 0, %s66
    %s67 = sphi 0, %s64
    %s68 = sphi 0, %s67
    %s84 = sphi 0, %s68
    %s88 = sphi 0, %s88
    %s90 = sphi 0, %s88
    %s91 = sphi 0, %s90
    %s105 = sphi 0, %s91
    %s109 = sphi 0, %s109
    %s111 = sphi 0, %s109
    %s112 = sphi 0, %s111
    %s126 = sphi 0, %s112
    %s130 = sphi 0, %s130
    %s132 = sphi 0, %s130
    %s133 = sphi 0, %s132
    %s147 = sphi 0, %s133
    %s151 = sphi 0, %s151
    %s153 = sphi 0, %s151
    %s154 = sphi 0, %s153
    %s168 = sphi 0, %s154
    %s174 = sphi 0, %s176
    %s177 = sphi 0, %s174
    %s178 = sphi 0, %s177
    %s194 = sphi 0, %s178
    %s200 = sphi 0, %s202
    %s203 = sphi 0, %s200
    %s204 = sphi 0, %s203
    %s220 = sphi 0, %s204
  $region4: #{rnn_forward.1} parent=0 // loop_header_branch
    %17 = sbr.rel (%p15) target = $region8
  $region5: #{rnn_forward.1} parent=0 // loop_body
    %s19 = ssub.s32 %s14, 1
    %s20 = ssub.s32 %s14, 2
    %s27 = sadd.s32 1, %s22
    %p28 = scmp.ge.s32.totalorder %s27, 2
    %s29 = scalar_select %p28, 0, %s27
    %s30 = sadd.s32 1, %s21
    %s31 = scalar_select %p28, %s30, %s21
    %p32 = scmp.ge.s32.totalorder %s31, 1
    %s33 = scalar_select %p32, 0, %s31
    %s34 = ssub.s32 %s22, %s29
    %s35 = ssub.s32 %s21, %s33
    %s36 = sor.u32 %s34, %s35
    %p37 = scmp.eq.s32.totalorder %s36, 0
    %s39 = sadd.s32 %s38, 1
    %s40 = scalar_select %p37, %s38, %s39
    %p43 = pneg %p37
    %p44 = scmp.eq.s32.totalorder %s14, 1
    %p45 = por %p43, %p44
    %p46 = scmp.ne.s32.totalorder %s38, %s41
    %p47 = scmp.eq.s32.totalorder %s14, 0
    %p48 = por %p46, %p47
    %p49 = scmp.ne.s32.totalorder %s38, %s41
    %p50 = scmp.eq.s32.totalorder %s19, 1
    %p51 = por %p49, %p50
    %p52 = scmp.ne.s32.totalorder %s41, %s42
    %p53 = scmp.eq.s32.totalorder %s19, 0
    %p54 = por %p52, %p53
    %p55 = scmp.ne.s32.totalorder %s41, %s42
    %p56 = scmp.eq.s32.totalorder %s20, 1
    %p57 = por %p55, %p56
    %p59 = scmp.ne.s32.totalorder %s42, %s58
    %p60 = scmp.eq.s32.totalorder %s20, 0
    %p61 = por %p59, %p60
    %s62 = ssub.s32 %s21, %s33
    %p63 = scmp.eq.s32.totalorder %s62, 0
    %s65 = sadd.s32 %s64, 1
    %s66 = scalar_select %p63, %s64, %s65
    %p69 = pneg %p63
    %p70 = scmp.eq.s32.totalorder %s14, 1
    %p71 = por %p69, %p70
    %p72 = scmp.ne.s32.totalorder %s64, %s67
    %p73 = scmp.eq.s32.totalorder %s14, 0
    %p74 = por %p72, %p73
    %p75 = scmp.ne.s32.totalorder %s64, %s67
    %p76 = scmp.eq.s32.totalorder %s19, 1
    %p77 = por %p75, %p76
    %p78 = scmp.ne.s32.totalorder %s67, %s68
    %p79 = scmp.eq.s32.totalorder %s19, 0
    %p80 = por %p78, %p79
    %p81 = scmp.ne.s32.totalorder %s67, %s68
    %p82 = scmp.eq.s32.totalorder %s20, 1
    %p83 = por %p81, %p82
    %p85 = scmp.ne.s32.totalorder %s68, %s84
    %p86 = scmp.eq.s32.totalorder %s20, 0
    %p87 = por %p85, %p86
    %s89 = sadd.s32 %s88, 1
    %p92 = scmp.eq.s32.totalorder %s14, 1
    %p93 = scmp.ne.s32.totalorder %s88, %s90
    %p94 = scmp.eq.s32.totalorder %s14, 0
    %p95 = por %p93, %p94
    %p96 = scmp.ne.s32.totalorder %s88, %s90
    %p97 = scmp.eq.s32.totalorder %s19, 1
    %p98 = por %p96, %p97
    %p99 = scmp.ne.s32.totalorder %s90, %s91
    %p100 = scmp.eq.s32.totalorder %s19, 0
    %p101 = por %p99, %p100
    %p102 = scmp.ne.s32.totalorder %s90, %s91
    %p103 = scmp.eq.s32.totalorder %s20, 1
    %p104 = por %p102, %p103
    %p106 = scmp.ne.s32.totalorder %s91, %s105
    %p107 = scmp.eq.s32.totalorder %s20, 0
    %p108 = por %p106, %p107
    %s110 = sadd.s32 %s109, 1
    %p113 = scmp.eq.s32.totalorder %s14, 1
    %p114 = scmp.ne.s32.totalorder %s109, %s111
    %p115 = scmp.eq.s32.totalorder %s14, 0
    %p116 = por %p114, %p115
    %p117 = scmp.ne.s32.totalorder %s109, %s111
    %p118 = scmp.eq.s32.totalorder %s19, 1
    %p119 = por %p117, %p118
    %p120 = scmp.ne.s32.totalorder %s111, %s112
    %p121 = scmp.eq.s32.totalorder %s19, 0
    %p122 = por %p120, %p121
    %p123 = scmp.ne.s32.totalorder %s111, %s112
    %p124 = scmp.eq.s32.totalorder %s20, 1
    %p125 = por %p123, %p124
    %p127 = scmp.ne.s32.totalorder %s112, %s126
    %p128 = scmp.eq.s32.totalorder %s20, 0
    %p129 = por %p127, %p128
    %s131 = sadd.s32 %s130, 1
    %p134 = scmp.eq.s32.totalorder %s14, 1
    %p135 = scmp.ne.s32.totalorder %s130, %s132
    %p136 = scmp.eq.s32.totalorder %s14, 0
    %p137 = por %p135, %p136
    %p138 = scmp.ne.s32.totalorder %s130, %s132
    %p139 = scmp.eq.s32.totalorder %s19, 1
    %p140 = por %p138, %p139
    %p141 = scmp.ne.s32.totalorder %s132, %s133
    %p142 = scmp.eq.s32.totalorder %s19, 0
    %p143 = por %p141, %p142
    %p144 = scmp.ne.s32.totalorder %s132, %s133
    %p145 = scmp.eq.s32.totalorder %s20, 1
    %p146 = por %p144, %p145
    %p148 = scmp.ne.s32.totalorder %s133, %s147
    %p149 = scmp.eq.s32.totalorder %s20, 0
    %p150 = por %p148, %p149
    %s152 = sadd.s32 %s151, 1
    %p155 = scmp.eq.s32.totalorder %s14, 1
    %p156 = scmp.ne.s32.totalorder %s151, %s153
    %p157 = scmp.eq.s32.totalorder %s14, 0
    %p158 = por %p156, %p157
    %p159 = scmp.ne.s32.totalorder %s151, %s153
    %p160 = scmp.eq.s32.totalorder %s19, 1
    %p161 = por %p159, %p160
    %p162 = scmp.ne.s32.totalorder %s153, %s154
    %p163 = scmp.eq.s32.totalorder %s19, 0
    %p164 = por %p162, %p163
    %p165 = scmp.ne.s32.totalorder %s153, %s154
    %p166 = scmp.eq.s32.totalorder %s20, 1
    %p167 = por %p165, %p166
    %p169 = scmp.ne.s32.totalorder %s154, %s168
    %p170 = scmp.eq.s32.totalorder %s20, 0
    %p171 = por %p169, %p170
    %s172 = ssub.s32 %s21, %s33
    %p173 = scmp.eq.s32.totalorder %s172, 0
    %s175 = sadd.s32 %s174, 1
    %s176 = scalar_select %p173, %s174, %s175
    %p179 = pneg %p173
    %p180 = scmp.eq.s32.totalorder %s14, 1
    %p181 = por %p179, %p180
    %p182 = scmp.ne.s32.totalorder %s174, %s177
    %p183 = scmp.eq.s32.totalorder %s14, 0
    %p184 = por %p182, %p183
    %p185 = scmp.ne.s32.totalorder %s174, %s177
    %p186 = scmp.eq.s32.totalorder %s19, 1
    %p187 = por %p185, %p186
    %p188 = scmp.ne.s32.totalorder %s177, %s178
    %p189 = scmp.eq.s32.totalorder %s19, 0
    %p190 = por %p188, %p189
    %p191 = scmp.ne.s32.totalorder %s177, %s178
    %p192 = scmp.eq.s32.totalorder %s20, 1
    %p193 = por %p191, %p192
    %p195 = scmp.ne.s32.totalorder %s178, %s194
    %p196 = scmp.eq.s32.totalorder %s20, 0
    %p197 = por %p195, %p196
    %s198 = ssub.s32 %s21, %s33
    %p199 = scmp.eq.s32.totalorder %s198, 0
    %s201 = sadd.s32 %s200, 1
    %s202 = scalar_select %p199, %s200, %s201
    %p205 = pneg %p199
    %p206 = scmp.eq.s32.totalorder %s14, 1
    %p207 = por %p205, %p206
    %p208 = scmp.ne.s32.totalorder %s200, %s203
    %p209 = scmp.eq.s32.totalorder %s14, 0
    %p210 = por %p208, %p209
    %p211 = scmp.ne.s32.totalorder %s200, %s203
    %p212 = scmp.eq.s32.totalorder %s19, 1
    %p213 = por %p211, %p212
    %p214 = scmp.ne.s32.totalorder %s203, %s204
    %p215 = scmp.eq.s32.totalorder %s19, 0
    %p216 = por %p214, %p215
    %p217 = scmp.ne.s32.totalorder %s203, %s204
    %p218 = scmp.eq.s32.totalorder %s20, 1
    %p219 = por %p217, %p218
    %p221 = scmp.ne.s32.totalorder %s204, %s220
    %p222 = scmp.eq.s32.totalorder %s20, 0
    %p223 = por %p221, %p222
    %p224 = scmp.le.s32.totalorder 1, %s14
    %p225 = scmp.lt.s32.totalorder %s14, 3
    %p226 = pnand %p224, %p225
    %p227 = pneg %p226
    // Predicated region
    $region9: #{rnn_forward.1} parent=5 // pred_check
      _
    $region10: #{rnn_forward.1} parent=5 // pred_check_branch
      %229 = sbr.rel (%p226) target = $region12
    $region11: #{rnn_forward.1} parent=5 // pred_region
      %s230 = ssub.s32 %s14, 1
      // Predicated region
      $region13: #{rnn_forward.1} parent=11 // pred_check
        %p231 = pneg %p80
      $region14: #{rnn_forward.1} parent=11 // pred_check_branch
        %233 = sbr.rel (%p231) target = $region16
      $region15: #{rnn_forward.1} parent=11 // pred_region
        %p234 = scmp.lt.s32.totalorder %s23, 0
        %s235 = scalar_select %p234, %s23, 0
        %s236 = smul.addr %s235, 8
        %s237 = scalar_lea.vmem %s1, %s236
      $region16: #{rnn_forward.1} parent=11 // pred_fallthru
        _
      // Predicated region
      $region17: #{rnn_forward.1} parent=11 // pred_check
        %p238 = pneg %p101
      $region18: #{rnn_forward.1} parent=11 // pred_check_branch
        %240 = sbr.rel (%p238) target = $region20
      $region19: #{rnn_forward.1} parent=11 // pred_region
        _
      $region20: #{rnn_forward.1} parent=11 // pred_fallthru
        _
      // Predicated region
      $region21: #{rnn_forward.1} parent=11 // pred_check
        %p241 = pneg %p122
      $region22: #{rnn_forward.1} parent=11 // pred_check_branch
        %243 = sbr.rel (%p241) target = $region24
      $region23: #{rnn_forward.1} parent=11 // pred_region
        _
      $region24: #{rnn_forward.1} parent=11 // pred_fallthru
        _
      // Predicated region
      $region25: #{rnn_forward.1} parent=11 // pred_check
        %p244 = pneg %p143
      $region26: #{rnn_forward.1} parent=11 // pred_check_branch
        %246 = sbr.rel (%p244) target = $region28
      $region27: #{rnn_forward.1} parent=11 // pred_region
        _
      $region28: #{rnn_forward.1} parent=11 // pred_fallthru
        _
      // Predicated region
      $region29: #{rnn_forward.1} parent=11 // pred_check
        %p247 = pneg %p164
      $region30: #{rnn_forward.1} parent=11 // pred_check_branch
        %249 = sbr.rel (%p247) target = $region32
      $region31: #{rnn_forward.1} parent=11 // pred_region
        _
      $region32: #{rnn_forward.1} parent=11 // pred_fallthru
        _
    $region12: #{rnn_forward.1} parent=5 // pred_fallthru
      _
    %p250 = scmp.lt.s32.totalorder %s14, 2
    // Predicated region
    $region33: #{rnn_forward.1} parent=5 // pred_check
      %p251 = pneg %p250
    $region34: #{rnn_forward.1} parent=5 // pred_check_branch
      %253 = sbr.rel (%p251) target = $region36
    $region35: #{rnn_forward.1} parent=5 // pred_region
      // Predicated region
      $region37: #{rnn_forward.1} parent=35 // pred_check
        %p254 = pneg %p48
      $region38: #{rnn_forward.1} parent=35 // pred_check_branch
        %256 = sbr.rel (%p254) target = $region40
      $region39: #{rnn_forward.1} parent=35 // pred_region
        %s257 = smul.u32 4, %s22
        %p258 = scmp.lt.s32.totalorder %s257, 7
        %s259 = scalar_select %p258, %s257, 7
        %p260 = scmp.lt.s32.totalorder %s21, 0
        %s261 = scalar_select %p260, %s21, 0
        %s262 = smul.addr %s261, 3
        %s263 = smul.addr %s259, 3
        %s264 = sadd.s32 %s262, %s263
        %s265 = smul.addr %s264, 4
        %s266 = scalar_lea.vmem %s0, %s265
        %s267 = smul.u32 4, %s22
      $region40: #{rnn_forward.1} parent=35 // pred_fallthru
        _
    $region36: #{rnn_forward.1} parent=5 // pred_fallthru
      _
    %p268 = scmp.le.s32.totalorder 1, %s14
    %p269 = scmp.lt.s32.totalorder %s14, 3
    %p270 = pnand %p268, %p269
    %p271 = pneg %p270
    // Predicated region
    $region41: #{rnn_forward.1} parent=5 // pred_check
      _
    $region42: #{rnn_forward.1} parent=5 // pred_check_branch
      %273 = sbr.rel (%p270) target = $region44
    $region43: #{rnn_forward.1} parent=5 // pred_region
      %s274 = ssub.s32 %s14, 1
      %s275 = smul.u32 4, %s24
      %p276 = scmp.lt.s32.totalorder %s275, 7
      %s277 = scalar_select %p276, %s275, 7
      %p278 = scmp.lt.s32.totalorder %s23, 0
      %s279 = scalar_select %p278, %s23, 0
      %s280 = smul.addr %s279, 3
      %s281 = smul.addr %s277, 3
      %s282 = sadd.s32 %s280, %s281
      %s283 = smul.addr %s282, 4
      %s284 = scalar_lea.vmem %s0, %s283
      %p285 = pneg %p54
      %p286 = pneg %p51
      %p287 = scmp.lt.s32.totalorder %s23, 0
      %s288 = scalar_select %p287, %s23, 0
      %s289 = smul.addr %s288, 8
      %s290 = scalar_lea.vmem %s1, %s289
      %p291 = pneg %p80
      %p292 = pneg %p77
      %p293 = pneg %p101
      %p294 = pneg %p98
      %p295 = pneg %p122
      %p296 = pneg %p119
      %p297 = pneg %p143
      %p298 = pneg %p140
      %p299 = pneg %p164
      %p300 = pneg %p161
      %p301 = pneg %p190
      %p302 = pneg %p187
      %p303 = scmp.lt.s32.totalorder %s23, 0
      %s304 = scalar_select %p303, %s23, 0
      %s305 = smul.addr %s304, 8
      %s306 = scalar_lea.vmem %s6, %s305
      %p307 = pneg %p216
      %p308 = pneg %p213
      %p309 = scmp.lt.s32.totalorder %s23, 0
      %s310 = scalar_select %p309, %s23, 0
      %s311 = smul.addr %s310, 8
      %s312 = scalar_lea.vmem %s7, %s311
      %s313 = smul.u32 4, %s24
      %p314 = scmp.lt.s32.totalorder %s313, 7
      %s315 = scalar_select %p314, %s313, 7
      %p316 = scmp.lt.s32.totalorder %s23, 0
      %s317 = scalar_select %p316, %s23, 0
      %s318 = smul.addr %s317, 3
      %s319 = smul.addr %s315, 3
      %s320 = sadd.s32 %s318, %s319
      %s321 = smul.addr %s320, 4
      %s322 = scalar_lea.vmem %s0, %s321
      %s323 = smul.u32 4, %s24
      %p324 = scmp.lt.s32.totalorder %s23, 0
      %s325 = scalar_select %p324, %s23, 0
      %s326 = smul.addr %s325, 8
      %s327 = scalar_lea.vmem %s1, %s326
      %p328 = scmp.lt.s32.totalorder %s23, 0
      %s329 = scalar_select %p328, %s23, 0
      %s330 = smul.addr %s329, 8
      %s331 = scalar_lea.vmem %s6, %s330
      %p332 = scmp.lt.s32.totalorder %s23, 0
      %s333 = scalar_select %p332, %s23, 0
      %s334 = smul.addr %s333, 8
      %s335 = scalar_lea.vmem %s7, %s334
      %p337 = scmp.eq.s32.totalorder %s24, 0
      // Predicated region
      $region45: #{rnn_forward.1} parent=43 // pred_check
        %p338 = pneg %p337
      $region46: #{rnn_forward.1} parent=43 // pred_check_branch
        %340 = sbr.rel (%p338) target = $region48
      $region47: #{rnn_forward.1} parent=43 // pred_region
        %v341 = vld [vmem:[%s327] sm:$0xff]
        %342 = vst [vmem:[#allocation2] sm:$0xff] %v341
      $region48: #{rnn_forward.1} parent=43 // pred_fallthru
        _
      %v343 = vld [vmem:[#allocation2] sm:$0xff]
      %v344 = vld [vmem:[%s322] sm:$0xff]
      %v345 = vld [vmem:[%s322 + $0x8] sm:$0xf]
      %v346 = vunpack.c.l.bf16 %v344
      %v347 = vunpack.c.h.bf16 %v344
      %v348 = vunpack.c.l.bf16 %v345
      %v349 = vpack.c.bf16 %v343, %v343
      %v350 = vld [vmem:[%s2] sm:$0xff]
      %v351 = vld [vmem:[%s2 + $0x8] sm:$0xf]
      %v352 = vld [vmem:[%s2 + $0xc] sm:$0xff]
      %v353 = vld [vmem:[%s2 + $0x14] sm:$0xf]
      %v354 = vld [vmem:[%s2 + $0x18] sm:$0xff]
      %v355 = vld [vmem:[%s2 + $0x20] sm:$0xf]
      %v356 = vld [vmem:[%s2 + $0x24] sm:$0xff]
      %v357 = vld [vmem:[%s2 + $0x2c] sm:$0xf]
      %v358 = vld [vmem:[%s2 + $0x30] sm:$0xff]
      %v359 = vld [vmem:[%s2 + $0x38] sm:$0xf]
      %v360 = vld [vmem:[%s2 + $0x3c] sm:$0xff]
      %v361 = vld [vmem:[%s2 + $0x44] sm:$0xf]
      %v362 = vld [vmem:[%s2 + $0x48] sm:$0xff]
      %v363 = vld [vmem:[%s2 + $0x50] sm:$0xf]
      %v364 = vld [vmem:[%s2 + $0x54] sm:$0xff]
      %v365 = vld [vmem:[%s2 + $0x5c] sm:$0xf]
      %v366 = vld [vmem:[%s2 + $0x60] sm:$0xff]
      %v367 = vld [vmem:[%s2 + $0x68] sm:$0xf]
      %v368 = vld [vmem:[%s2 + $0x6c] sm:$0xff]
      %v369 = vld [vmem:[%s2 + $0x74] sm:$0xf]
      %v370 = vld [vmem:[%s2 + $0x78] sm:$0xff]
      %v371 = vld [vmem:[%s2 + $0x80] sm:$0xf]
      %v372 = vld [vmem:[%s2 + $0x84] sm:$0xff]
      %v373 = vld [vmem:[%s2 + $0x8c] sm:$0xf]
      %v374 = vld [vmem:[%s2 + $0x90] sm:$0xff]
      %v375 = vld [vmem:[%s2 + $0x98] sm:$0xf]
      %v376 = vld [vmem:[%s2 + $0x9c] sm:$0xff]
      %v377 = vld [vmem:[%s2 + $0xa4] sm:$0xf]
      %v378 = vld [vmem:[%s2 + $0xa8] sm:$0xff]
      %v379 = vld [vmem:[%s2 + $0xb0] sm:$0xf]
      %v380 = vld [vmem:[%s2 + $0xb4] sm:$0xff]
      %v381 = vld [vmem:[%s2 + $0xbc] sm:$0xf]
      %v414 = vunpack.c.l.b16 %v350
      %v415 = vunpack.c.h.b16 %v350
      %v416 = vunpack.c.l.b16 %v351
      %v417 = vunpack.c.l.b16 %v352
      %v418 = vunpack.c.h.b16 %v352
      %v419 = vunpack.c.l.b16 %v353
      %v420 = vunpack.c.l.b16 %v354
      %v421 = vunpack.c.h.b16 %v354
      %v422 = vunpack.c.l.b16 %v355
      %v423 = vunpack.c.l.b16 %v356
      %v424 = vunpack.c.h.b16 %v356
      %v425 = vunpack.c.l.b16 %v357
      %v426 = vunpack.c.l.b16 %v358
      %v427 = vunpack.c.h.b16 %v358
      %v428 = vunpack.c.l.b16 %v359
      %v429 = vunpack.c.l.b16 %v360
      %v430 = vunpack.c.h.b16 %v360
      %v431 = vunpack.c.l.b16 %v361
      %v432 = vunpack.c.l.b16 %v362
      %v433 = vunpack.c.h.b16 %v362
      %v434 = vunpack.c.l.b16 %v363
      %v435 = vunpack.c.l.b16 %v364
      %v436 = vunpack.c.h.b16 %v364
      %v437 = vunpack.c.l.b16 %v365
      %v438 = vunpack.c.l.b16 %v366
      %v439 = vunpack.c.h.b16 %v366
      %v440 = vunpack.c.l.b16 %v367
      %v441 = vunpack.c.l.b16 %v368
      %v442 = vunpack.c.h.b16 %v368
      %v443 = vunpack.c.l.b16 %v369
      %v444 = vunpack.c.l.b16 %v370
      %v445 = vunpack.c.h.b16 %v370
      %v446 = vunpack.c.l.b16 %v371
      %v447 = vunpack.c.l.b16 %v372
      %v448 = vunpack.c.h.b16 %v372
      %v449 = vunpack.c.l.b16 %v373
      %v450 = vunpack.c.l.b16 %v374
      %v451 = vunpack.c.h.b16 %v374
      %v452 = vunpack.c.l.b16 %v375
      %v453 = vunpack.c.l.b16 %v376
      %v454 = vunpack.c.h.b16 %v376
      %v455 = vunpack.c.l.b16 %v377
      %v456 = vunpack.c.l.b16 %v378
      %v457 = vunpack.c.h.b16 %v378
      %v458 = vunpack.c.l.b16 %v379
      %v459 = vunpack.c.l.b16 %v380
      %v460 = vunpack.c.h.b16 %v380
      %v461 = vunpack.c.l.b16 %v381
      %v462 = vpack.c.b16 %v417, %v414
      %v463 = vpack.c.b16 %v418, %v415
      %v464 = vpack.c.b16 %v419, %v416
      %v465 = vpack.c.b16 %v423, %v420
      %v466 = vpack.c.b16 %v424, %v421
      %v467 = vpack.c.b16 %v425, %v422
      %v468 = vpack.c.b16 %v429, %v426
      %v469 = vpack.c.b16 %v430, %v427
      %v470 = vpack.c.b16 %v431, %v428
      %v471 = vpack.c.b16 %v435, %v432
      %v472 = vpack.c.b16 %v436, %v433
      %v473 = vpack.c.b16 %v437, %v434
      %v474 = vpack.c.b16 %v441, %v438
      %v475 = vpack.c.b16 %v442, %v439
      %v476 = vpack.c.b16 %v443, %v440
      %v477 = vpack.c.b16 %v447, %v444
      %v478 = vpack.c.b16 %v448, %v445
      %v479 = vpack.c.b16 %v449, %v446
      %v480 = vpack.c.b16 %v453, %v450
      %v481 = vpack.c.b16 %v454, %v451
      %v482 = vpack.c.b16 %v455, %v452
      %v483 = vpack.c.b16 %v459, %v456
      %v484 = vpack.c.b16 %v460, %v457
      %v485 = vpack.c.b16 %v461, %v458
      %510 = vmatprep.subr.bf16.mxu0 %v463
      %511 = vmatpush1.bf16.msra.mxu0 %v462
      %512 = vmatprep.subr.bf16.mxu0 %v466
      %513 = vmatpush1.bf16.msra.mxu0 %v465
      %514 = vmatprep.subr.bf16.mxu0 %v469
      %515 = vmatpush1.bf16.msra.mxu0 %v468
      %516 = vmatprep.subr.bf16.mxu0 %v472
      %517 = vmatpush1.bf16.msra.mxu0 %v471
      %518 = vmatprep.subr.bf16.mxu0 %v475
      %519 = vmatpush1.bf16.msra.mxu0 %v474
      %520 = vmatprep.subr.bf16.mxu0 %v478
      %521 = vmatpush1.bf16.msra.mxu0 %v477
      %522 = vmatprep.subr.bf16.mxu0 %v481
      %523 = vmatpush1.bf16.msra.mxu0 %v480
      %524 = vmatprep.subr.bf16.mxu0 %v484
      %525 = vmatpush1.bf16.msra.mxu0 %v483
      %526 = vmatprep.subr.bf16.mxu0 0
      %527 = vmatpush1.bf16.msra.mxu0 0
      %528 = vmatprep.subr.bf16.mxu0 0
      %529 = vmatpush1.bf16.msra.mxu0 0
      %530 = vmatprep.subr.bf16.mxu0 0
      %531 = vmatpush1.bf16.msra.mxu0 0
      %532 = vmatprep.subr.bf16.mxu0 0
      %533 = vmatpush1.bf16.msra.mxu0 0
      %534 = vmatprep.subr.bf16.mxu0 0
      %535 = vmatpush1.bf16.msra.mxu0 0
      %536 = vmatprep.subr.bf16.mxu0 0
      %537 = vmatpush1.bf16.msra.mxu0 0
      %538 = vmatprep.subr.bf16.mxu0 0
      %539 = vmatpush1.bf16.msra.mxu0 0
      %540 = vmatprep.subr.bf16.mxu0 0
      %541 = vmatpush1.bf16.msra.mxu0 0
      %542 = vmatprep.mubr.bf16.mxu0 0
      %543 = vmatmul.mubr.bf16.gmra.mrb[0].mxu0 %v349
      %v544 = vpop.f32.mrb[0].mxu0
      %v545 = vadd.f32 0.0, %v544
      %v546 = vpop.f32.mrb[0].mxu0
      %v547 = vadd.f32 0.0, %v546
      %v548 = vpop.f32.mrb[0].mxu0
      %v549 = vpop.f32.mrb[0].mxu0
      %550 = vdwg.mxu0
      %551 = vmatprep.subr.bf16.mxu0 0
      %552 = vmatpush1.bf16.msra.mxu0 %v464
      %553 = vmatprep.subr.bf16.mxu0 0
      %554 = vmatpush1.bf16.msra.mxu0 %v467
      %555 = vmatprep.subr.bf16.mxu0 0
      %556 = vmatpush1.bf16.msra.mxu0 %v470
      %557 = vmatprep.subr.bf16.mxu0 0
      %558 = vmatpush1.bf16.msra.mxu0 %v473
      %559 = vmatprep.subr.bf16.mxu0 0
      %560 = vmatpush1.bf16.msra.mxu0 %v476
      %561 = vmatprep.subr.bf16.mxu0 0
      %562 = vmatpush1.bf16.msra.mxu0 %v479
      %563 = vmatprep.subr.bf16.mxu0 0
      %564 = vmatpush1.bf16.msra.mxu0 %v482
      %565 = vmatprep.subr.bf16.mxu0 0
      %566 = vmatpush1.bf16.msra.mxu0 %v485
      %567 = vmatprep.subr.bf16.mxu0 0
      %568 = vmatpush1.bf16.msra.mxu0 0
      %569 = vmatprep.subr.bf16.mxu0 0
      %570 = vmatpush1.bf16.msra.mxu0 0
      %571 = vmatprep.subr.bf16.mxu0 0
      %572 = vmatpush1.bf16.msra.mxu0 0
      %573 = vmatprep.subr.bf16.mxu0 0
      %574 = vmatpush1.bf16.msra.mxu0 0
      %575 = vmatprep.subr.bf16.mxu0 0
      %576 = vmatpush1.bf16.msra.mxu0 0
      %577 = vmatprep.subr.bf16.mxu0 0
      %578 = vmatpush1.bf16.msra.mxu0 0
      %579 = vmatprep.subr.bf16.mxu0 0
      %580 = vmatpush1.bf16.msra.mxu0 0
      %581 = vmatprep.subr.bf16.mxu0 0
      %582 = vmatpush1.bf16.msra.mxu0 0
      %583 = vmatprep.mubr.bf16.mxu0 0
      %584 = vmatmul.mubr.bf16.gmra.mrb[0].mxu0 %v349
      %v585 = vpop.f32.mrb[0].mxu0
      %v586 = vadd.f32 0.0, %v585
      %v587 = vpop.f32.mrb[0].mxu0
      %v588 = vpop.f32.mrb[0].mxu0
      %v589 = vpop.f32.mrb[0].mxu0
      %590 = vdwg.mxu0
      %v591 = vadd.f32 %v346, %v545
      %v592 = vxor.u32 %v591, 2147483648
      %v593 = vmul.f32 %v592, 1.442695
      %v594 = vpow.pop %v593
      %v595 = vadd.f32 %v594, 1.0
      %v596 = vrcp.pop %v595
      %v597 = vmul.f32 1.0, %v596
      %v598 = vadd.f32 %v347, %v547
      %v599 = vxor.u32 %v598, 2147483648
      %v600 = vmul.f32 %v599, 1.442695
      %v601 = vpow.pop %v600
      %v602 = vadd.f32 %v601, 1.0
      %v603 = vrcp.pop %v602
      %v604 = vmul.f32 1.0, %v603
      %v605 = vld [vmem:[%s3] sm:$0x1]
      %v607 = vlaneseq
      %v608 = vshrl.u32 %v607, 7
      %v609 = vsub.s32 0, %v608
      %v610 = vrot.slane %v605, %v609
      %v612 = vadd.f32 %v586, %v610
      %v613 = vmul.f32 %v597, %v612
      %v614 = vadd.f32 %v348, %v613
      %v615 = vtanh.pop %v614
      %v616 = vsub.f32 1.0, %v604
      %v617 = vmul.f32 %v616, %v615
      %v618 = vmul.f32 %v604, %v343
      %v619 = vadd.f32 %v617, %v618
      %s620 = scalar_lea.vmem %s322, 12
      %v621 = vld [vmem:[%s620] sm:$0xff]
      %v622 = vld [vmem:[%s620 + $0x8] sm:$0xf]
      %v623 = vunpack.c.l.bf16 %v621
      %v624 = vunpack.c.h.bf16 %v621
      %v625 = vunpack.c.l.bf16 %v622
      %v626 = vpack.c.bf16 %v619, %v619
      %627 = vmatprep.subr.bf16.mxu0 %v463
      %628 = vmatpush1.bf16.msra.mxu0 %v462
      %629 = vmatprep.subr.bf16.mxu0 %v466
      %630 = vmatpush1.bf16.msra.mxu0 %v465
      %631 = vmatprep.subr.bf16.mxu0 %v469
      %632 = vmatpush1.bf16.msra.mxu0 %v468
      %633 = vmatprep.subr.bf16.mxu0 %v472
      %634 = vmatpush1.bf16.msra.mxu0 %v471
      %635 = vmatprep.subr.bf16.mxu0 %v475
      %636 = vmatpush1.bf16.msra.mxu0 %v474
      %637 = vmatprep.subr.bf16.mxu0 %v478
      %638 = vmatpush1.bf16.msra.mxu0 %v477
      %639 = vmatprep.subr.bf16.mxu0 %v481
      %640 = vmatpush1.bf16.msra.mxu0 %v480
      %641 = vmatprep.subr.bf16.mxu0 %v484
      %642 = vmatpush1.bf16.msra.mxu0 %v483
      %643 = vmatprep.subr.bf16.mxu0 0
      %644 = vmatpush1.bf16.msra.mxu0 0
      %645 = vmatprep.subr.bf16.mxu0 0
      %646 = vmatpush1.bf16.msra.mxu0 0
      %647 = vmatprep.subr.bf16.mxu0 0
      %648 = vmatpush1.bf16.msra.mxu0 0
      %649 = vmatprep.subr.bf16.mxu0 0
      %650 = vmatpush1.bf16.msra.mxu0 0
      %651 = vmatprep.subr.bf16.mxu0 0
      %652 = vmatpush1.bf16.msra.mxu0 0
      %653 = vmatprep.subr.bf16.mxu0 0
      %654 = vmatpush1.bf16.msra.mxu0 0
      %655 = vmatprep.subr.bf16.mxu0 0
      %656 = vmatpush1.bf16.msra.mxu0 0
      %657 = vmatprep.subr.bf16.mxu0 0
      %658 = vmatpush1.bf16.msra.mxu0 0
      %659 = vmatprep.mubr.bf16.mxu0 0
      %660 = vmatmul.mubr.bf16.gmra.mrb[0].mxu0 %v626
      %v661 = vpop.f32.mrb[0].mxu0
      %v662 = vadd.f32 0.0, %v661
      %v663 = vpop.f32.mrb[0].mxu0
      %v664 = vadd.f32 0.0, %v663
      %v665 = vpop.f32.mrb[0].mxu0
      %v666 = vpop.f32.mrb[0].mxu0
      %667 = vdwg.mxu0
      %668 = vmatprep.subr.bf16.mxu0 0
      %669 = vmatpush1.bf16.msra.mxu0 %v464
      %670 = vmatprep.subr.bf16.mxu0 0
      %671 = vmatpush1.bf16.msra.mxu0 %v467
      %672 = vmatprep.subr.bf16.mxu0 0
      %673 = vmatpush1.bf16.msra.mxu0 %v470
      %674 = vmatprep.subr.bf16.mxu0 0
      %675 = vmatpush1.bf16.msra.mxu0 %v473
      %676 = vmatprep.subr.bf16.mxu0 0
      %677 = vmatpush1.bf16.msra.mxu0 %v476
      %678 = vmatprep.subr.bf16.mxu0 0
      %679 = vmatpush1.bf16.msra.mxu0 %v479
      %680 = vmatprep.subr.bf16.mxu0 0
      %681 = vmatpush1.bf16.msra.mxu0 %v482
      %682 = vmatprep.subr.bf16.mxu0 0
      %683 = vmatpush1.bf16.msra.mxu0 %v485
      %684 = vmatprep.subr.bf16.mxu0 0
      %685 = vmatpush1.bf16.msra.mxu0 0
      %686 = vmatprep.subr.bf16.mxu0 0
      %687 = vmatpush1.bf16.msra.mxu0 0
      %688 = vmatprep.subr.bf16.mxu0 0
      %689 = vmatpush1.bf16.msra.mxu0 0
      %690 = vmatprep.subr.bf16.mxu0 0
      %691 = vmatpush1.bf16.msra.mxu0 0
      %692 = vmatprep.subr.bf16.mxu0 0
      %693 = vmatpush1.bf16.msra.mxu0 0
      %694 = vmatprep.subr.bf16.mxu0 0
      %695 = vmatpush1.bf16.msra.mxu0 0
      %696 = vmatprep.subr.bf16.mxu0 0
      %697 = vmatpush1.bf16.msra.mxu0 0
      %698 = vmatprep.subr.bf16.mxu0 0
      %699 = vmatpush1.bf16.msra.mxu0 0
      %700 = vmatprep.mubr.bf16.mxu0 0
      %701 = vmatmul.mubr.bf16.gmra.mrb[0].mxu0 %v626
      %v702 = vpop.f32.mrb[0].mxu0
      %v703 = vadd.f32 0.0, %v702
      %v704 = vpop.f32.mrb[0].mxu0
      %v705 = vpop.f32.mrb[0].mxu0
      %v706 = vpop.f32.mrb[0].mxu0
      %707 = vdwg.mxu0
      %v708 = vadd.f32 %v623, %v662
      %v709 = vxor.u32 %v708, 2147483648
      %v710 = vmul.f32 %v709, 1.442695
      %v711 = vpow.pop %v710
      %v712 = vadd.f32 %v711, 1.0
      %v713 = vrcp.pop %v712
      %v714 = vmul.f32 1.0, %v713
      %v715 = vadd.f32 %v624, %v664
      %v716 = vxor.u32 %v715, 2147483648
      %v717 = vmul.f32 %v716, 1.442695
      %v718 = vpow.pop %v717
      %v719 = vadd.f32 %v718, 1.0
      %v720 = vrcp.pop %v719
      %v721 = vmul.f32 1.0, %v720
      %v722 = vadd.f32 %v703, %v610
      %v723 = vmul.f32 %v714, %v722
      %v724 = vadd.f32 %v625, %v723
      %v725 = vtanh.pop %v724
      %v726 = vsub.f32 1.0, %v721
      %v727 = vmul.f32 %v726, %v725
      %v728 = vmul.f32 %v721, %v619
      %v729 = vadd.f32 %v727, %v728
      %s730 = scalar_lea.vmem %s322, 24
      %v731 = vld [vmem:[%s730] sm:$0xff]
      %v732 = vld [vmem:[%s730 + $0x8] sm:$0xf]
      %v733 = vunpack.c.l.bf16 %v731
      %v734 = vunpack.c.h.bf16 %v731
      %v735 = vunpack.c.l.bf16 %v732
      %v736 = vpack.c.bf16 %v729, %v729
      %737 = vmatprep.subr.bf16.mxu0 %v463
      %738 = vmatpush1.bf16.msra.mxu0 %v462
      %739 = vmatprep.subr.bf16.mxu0 %v466
      %740 = vmatpush1.bf16.msra.mxu0 %v465
      %741 = vmatprep.subr.bf16.mxu0 %v469
      %742 = vmatpush1.bf16.msra.mxu0 %v468
      %743 = vmatprep.subr.bf16.mxu0 %v472
      %744 = vmatpush1.bf16.msra.mxu0 %v471
      %745 = vmatprep.subr.bf16.mxu0 %v475
      %746 = vmatpush1.bf16.msra.mxu0 %v474
      %747 = vmatprep.subr.bf16.mxu0 %v478
      %748 = vmatpush1.bf16.msra.mxu0 %v477
      %749 = vmatprep.subr.bf16.mxu0 %v481
      %750 = vmatpush1.bf16.msra.mxu0 %v480
      %751 = vmatprep.subr.bf16.mxu0 %v484
      %752 = vmatpush1.bf16.msra.mxu0 %v483
      %753 = vmatprep.subr.bf16.mxu0 0
      %754 = vmatpush1.bf16.msra.mxu0 0
      %755 = vmatprep.subr.bf16.mxu0 0
      %756 = vmatpush1.bf16.msra.mxu0 0
      %757 = vmatprep.subr.bf16.mxu0 0
      %758 = vmatpush1.bf16.msra.mxu0 0
      %759 = vmatprep.subr.bf16.mxu0 0
      %760 = vmatpush1.bf16.msra.mxu0 0
      %761 = vmatprep.subr.bf16.mxu0 0
      %762 = vmatpush1.bf16.msra.mxu0 0
      %763 = vmatprep.subr.bf16.mxu0 0
      %764 = vmatpush1.bf16.msra.mxu0 0
      %765 = vmatprep.subr.bf16.mxu0 0
      %766 = vmatpush1.bf16.msra.mxu0 0
      %767 = vmatprep.subr.bf16.mxu0 0
      %768 = vmatpush1.bf16.msra.mxu0 0
      %769 = vmatprep.mubr.bf16.mxu0 0
      %770 = vmatmul.mubr.bf16.gmra.mrb[0].mxu0 %v736
      %v771 = vpop.f32.mrb[0].mxu0
      %v772 = vadd.f32 0.0, %v771
      %v773 = vpop.f32.mrb[0].mxu0
      %v774 = vadd.f32 0.0, %v773
      %v775 = vpop.f32.mrb[0].mxu0
      %v776 = vpop.f32.mrb[0].mxu0
      %777 = vdwg.mxu0
      %778 = vmatprep.subr.bf16.mxu0 0
      %779 = vmatpush1.bf16.msra.mxu0 %v464
      %780 = vmatprep.subr.bf16.mxu0 0
      %781 = vmatpush1.bf16.msra.mxu0 %v467
      %782 = vmatprep.subr.bf16.mxu0 0
      %783 = vmatpush1.bf16.msra.mxu0 %v470
      %784 = vmatprep.subr.bf16.mxu0 0
      %785 = vmatpush1.bf16.msra.mxu0 %v473
      %786 = vmatprep.subr.bf16.mxu0 0
      %787 = vmatpush1.bf16.msra.mxu0 %v476
      %788 = vmatprep.subr.bf16.mxu0 0
      %789 = vmatpush1.bf16.msra.mxu0 %v479
      %790 = vmatprep.subr.bf16.mxu0 0
      %791 = vmatpush1.bf16.msra.mxu0 %v482
      %792 = vmatprep.subr.bf16.mxu0 0
      %793 = vmatpush1.bf16.msra.mxu0 %v485
      %794 = vmatprep.subr.bf16.mxu0 0
      %795 = vmatpush1.bf16.msra.mxu0 0
      %796 = vmatprep.subr.bf16.mxu0 0
      %797 = vmatpush1.bf16.msra.mxu0 0
      %798 = vmatprep.subr.bf16.mxu0 0
      %799 = vmatpush1.bf16.msra.mxu0 0
      %800 = vmatprep.subr.bf16.mxu0 0
      %801 = vmatpush1.bf16.msra.mxu0 0
      %802 = vmatprep.subr.bf16.mxu0 0
      %803 = vmatpush1.bf16.msra.mxu0 0
      %804 = vmatprep.subr.bf16.mxu0 0
      %805 = vmatpush1.bf16.msra.mxu0 0
      %806 = vmatprep.subr.bf16.mxu0 0
      %807 = vmatpush1.bf16.msra.mxu0 0
      %808 = vmatprep.subr.bf16.mxu0 0
      %809 = vmatpush1.bf16.msra.mxu0 0
      %810 = vmatprep.mubr.bf16.mxu0 0
      %811 = vmatmul.mubr.bf16.gmra.mrb[0].mxu0 %v736
      %v812 = vpop.f32.mrb[0].mxu0
      %v813 = vadd.f32 0.0, %v812
      %v814 = vpop.f32.mrb[0].mxu0
      %v815 = vpop.f32.mrb[0].mxu0
      %v816 = vpop.f32.mrb[0].mxu0
      %817 = vdwg.mxu0
      %v818 = vadd.f32 %v733, %v772
      %v819 = vxor.u32 %v818, 2147483648
      %v820 = vmul.f32 %v819, 1.442695
      %v821 = vpow.pop %v820
      %v822 = vadd.f32 %v821, 1.0
      %v823 = vrcp.pop %v822
      %v824 = vmul.f32 1.0, %v823
      %v825 = vadd.f32 %v734, %v774
      %v826 = vxor.u32 %v825, 2147483648
      %v827 = vmul.f32 %v826, 1.442695
      %v828 = vpow.pop %v827
      %v829 = vadd.f32 %v828, 1.0
      %v830 = vrcp.pop %v829
      %v831 = vmul.f32 1.0, %v830
      %v832 = vadd.f32 %v813, %v610
      %v833 = vmul.f32 %v824, %v832
      %v834 = vadd.f32 %v735, %v833
      %v835 = vtanh.pop %v834
      %v836 = vsub.f32 1.0, %v831
      %v837 = vmul.f32 %v836, %v835
      %v838 = vmul.f32 %v831, %v729
      %v839 = vadd.f32 %v837, %v838
      %s840 = scalar_lea.vmem %s322, 36
      %v841 = vld [vmem:[%s840] sm:$0xff]
      %v842 = vld [vmem:[%s840 + $0x8] sm:$0xf]
      %v843 = vunpack.c.l.bf16 %v841
      %v844 = vunpack.c.h.bf16 %v841
      %v845 = vunpack.c.l.bf16 %v842
      %v846 = vpack.c.bf16 %v839, %v839
      %847 = vmatprep.subr.bf16.mxu0 %v463
      %848 = vmatpush1.bf16.msra.mxu0 %v462
      %849 = vmatprep.subr.bf16.mxu0 %v466
      %850 = vmatpush1.bf16.msra.mxu0 %v465
      %851 = vmatprep.subr.bf16.mxu0 %v469
      %852 = vmatpush1.bf16.msra.mxu0 %v468
      %853 = vmatprep.subr.bf16.mxu0 %v472
      %854 = vmatpush1.bf16.msra.mxu0 %v471
      %855 = vmatprep.subr.bf16.mxu0 %v475
      %856 = vmatpush1.bf16.msra.mxu0 %v474
      %857 = vmatprep.subr.bf16.mxu0 %v478
      %858 = vmatpush1.bf16.msra.mxu0 %v477
      %859 = vmatprep.subr.bf16.mxu0 %v481
      %860 = vmatpush1.bf16.msra.mxu0 %v480
      %861 = vmatprep.subr.bf16.mxu0 %v484
      %862 = vmatpush1.bf16.msra.mxu0 %v483
      %863 = vmatprep.subr.bf16.mxu0 0
      %864 = vmatpush1.bf16.msra.mxu0 0
      %865 = vmatprep.subr.bf16.mxu0 0
      %866 = vmatpush1.bf16.msra.mxu0 0
      %867 = vmatprep.subr.bf16.mxu0 0
      %868 = vmatpush1.bf16.msra.mxu0 0
      %869 = vmatprep.subr.bf16.mxu0 0
      %870 = vmatpush1.bf16.msra.mxu0 0
      %871 = vmatprep.subr.bf16.mxu0 0
      %872 = vmatpush1.bf16.msra.mxu0 0
      %873 = vmatprep.subr.bf16.mxu0 0
      %874 = vmatpush1.bf16.msra.mxu0 0
      %875 = vmatprep.subr.bf16.mxu0 0
      %876 = vmatpush1.bf16.msra.mxu0 0
      %877 = vmatprep.subr.bf16.mxu0 0
      %878 = vmatpush1.bf16.msra.mxu0 0
      %879 = vmatprep.mubr.bf16.mxu0 0
      %880 = vmatmul.mubr.bf16.gmra.mrb[0].mxu0 %v846
      %v881 = vpop.f32.mrb[0].mxu0
      %v882 = vadd.f32 0.0, %v881
      %v883 = vpop.f32.mrb[0].mxu0
      %v884 = vadd.f32 0.0, %v883
      %v885 = vpop.f32.mrb[0].mxu0
      %v886 = vpop.f32.mrb[0].mxu0
      %887 = vdwg.mxu0
      %888 = vmatprep.subr.bf16.mxu0 0
      %889 = vmatpush1.bf16.msra.mxu0 %v464
      %890 = vmatprep.subr.bf16.mxu0 0
      %891 = vmatpush1.bf16.msra.mxu0 %v467
      %892 = vmatprep.subr.bf16.mxu0 0
      %893 = vmatpush1.bf16.msra.mxu0 %v470
      %894 = vmatprep.subr.bf16.mxu0 0
      %895 = vmatpush1.bf16.msra.mxu0 %v473
      %896 = vmatprep.subr.bf16.mxu0 0
      %897 = vmatpush1.bf16.msra.mxu0 %v476
      %898 = vmatprep.subr.bf16.mxu0 0
      %899 = vmatpush1.bf16.msra.mxu0 %v479
      %900 = vmatprep.subr.bf16.mxu0 0
      %901 = vmatpush1.bf16.msra.mxu0 %v482
      %902 = vmatprep.subr.bf16.mxu0 0
      %903 = vmatpush1.bf16.msra.mxu0 %v485
      %904 = vmatprep.subr.bf16.mxu0 0
      %905 = vmatpush1.bf16.msra.mxu0 0
      %906 = vmatprep.subr.bf16.mxu0 0
      %907 = vmatpush1.bf16.msra.mxu0 0
      %908 = vmatprep.subr.bf16.mxu0 0
      %909 = vmatpush1.bf16.msra.mxu0 0
      %910 = vmatprep.subr.bf16.mxu0 0
      %911 = vmatpush1.bf16.msra.mxu0 0
      %912 = vmatprep.subr.bf16.mxu0 0
      %913 = vmatpush1.bf16.msra.mxu0 0
      %914 = vmatprep.subr.bf16.mxu0 0
      %915 = vmatpush1.bf16.msra.mxu0 0
      %916 = vmatprep.subr.bf16.mxu0 0
      %917 = vmatpush1.bf16.msra.mxu0 0
      %918 = vmatprep.subr.bf16.mxu0 0
      %919 = vmatpush1.bf16.msra.mxu0 0
      %920 = vmatprep.mubr.bf16.mxu0 0
      %921 = vmatmul.mubr.bf16.gmra.mrb[0].mxu0 %v846
      %v922 = vpop.f32.mrb[0].mxu0
      %v923 = vadd.f32 0.0, %v922
      %v924 = vpop.f32.mrb[0].mxu0
      %v925 = vpop.f32.mrb[0].mxu0
      %v926 = vpop.f32.mrb[0].mxu0
      %927 = vdwg.mxu0
      %v928 = vadd.f32 %v843, %v882
      %v929 = vxor.u32 %v928, 2147483648
      %v930 = vmul.f32 %v929, 1.442695
      %v931 = vpow.pop %v930
      %v932 = vadd.f32 %v931, 1.0
      %v933 = vrcp.pop %v932
      %v934 = vmul.f32 1.0, %v933
      %v935 = vadd.f32 %v844, %v884
      %v936 = vxor.u32 %v935, 2147483648
      %v937 = vmul.f32 %v936, 1.442695
      %v938 = vpow.pop %v937
      %v939 = vadd.f32 %v938, 1.0
      %v940 = vrcp.pop %v939
      %v941 = vmul.f32 1.0, %v940
      %v942 = vadd.f32 %v923, %v610
      %v943 = vmul.f32 %v934, %v942
      %v944 = vadd.f32 %v845, %v943
      %v945 = vtanh.pop %v944
      %v946 = vsub.f32 1.0, %v941
      %v947 = vmul.f32 %v946, %v945
      %v948 = vmul.f32 %v941, %v839
      %v949 = vadd.f32 %v947, %v948
      %950 = vst [vmem:[#allocation2] sm:$0xff] %v949
      %p951 = scmp.eq.s32.totalorder %s24, 1
      // Predicated region
      $region49: #{rnn_forward.1} parent=43 // pred_check
        %p952 = pneg %p951
      $region50: #{rnn_forward.1} parent=43 // pred_check_branch
        %954 = sbr.rel (%p952) target = $region52
      $region51: #{rnn_forward.1} parent=43 // pred_region
        %955 = vst [vmem:[%s335] sm:$0xff] %v949
        %v956 = vpack.c.bf16 %v949, %v949
        %v957 = vld [vmem:[%s4] sm:$0xf]
        %v958 = vld [vmem:[%s4 + $0x4] sm:$0xf]
        %v959 = vld [vmem:[%s4 + $0x8] sm:$0xf]
        %v960 = vld [vmem:[%s4 + $0xc] sm:$0xf]
        %v961 = vld [vmem:[%s4 + $0x10] sm:$0xf]
        %v962 = vld [vmem:[%s4 + $0x14] sm:$0xf]
        %v963 = vld [vmem:[%s4 + $0x18] sm:$0xf]
        %v964 = vld [vmem:[%s4 + $0x1c] sm:$0xf]
        %v965 = vld [vmem:[%s4 + $0x20] sm:$0xf]
        %v966 = vld [vmem:[%s4 + $0x24] sm:$0xf]
        %v967 = vld [vmem:[%s4 + $0x28] sm:$0xf]
        %v968 = vld [vmem:[%s4 + $0x2c] sm:$0xf]
        %v969 = vld [vmem:[%s4 + $0x30] sm:$0xf]
        %v970 = vld [vmem:[%s4 + $0x34] sm:$0xf]
        %v971 = vld [vmem:[%s4 + $0x38] sm:$0xf]
        %v972 = vld [vmem:[%s4 + $0x3c] sm:$0xf]
        %v973 = vld [vmem:[%s5] sm:$0x1]
        %v975 = vlaneseq
        %v976 = vshrl.u32 %v975, 7
        %v977 = vsub.s32 0, %v976
        %v978 = vrot.slane %v973, %v977
        %v996 = vunpack.c.l.b16 %v957
        %v997 = vunpack.c.l.b16 %v958
        %v998 = vunpack.c.l.b16 %v959
        %v999 = vunpack.c.l.b16 %v960
        %v1000 = vunpack.c.l.b16 %v961
        %v1001 = vunpack.c.l.b16 %v962
        %v1002 = vunpack.c.l.b16 %v963
        %v1003 = vunpack.c.l.b16 %v964
        %v1004 = vunpack.c.l.b16 %v965
        %v1005 = vunpack.c.l.b16 %v966
        %v1006 = vunpack.c.l.b16 %v967
        %v1007 = vunpack.c.l.b16 %v968
        %v1008 = vunpack.c.l.b16 %v969
        %v1009 = vunpack.c.l.b16 %v970
        %v1010 = vunpack.c.l.b16 %v971
        %v1011 = vunpack.c.l.b16 %v972
        %v1012 = vpack.c.b16 %v997, %v996
        %v1013 = vpack.c.b16 %v999, %v998
        %v1014 = vpack.c.b16 %v1001, %v1000
        %v1015 = vpack.c.b16 %v1003, %v1002
        %v1016 = vpack.c.b16 %v1005, %v1004
        %v1017 = vpack.c.b16 %v1007, %v1006
        %v1018 = vpack.c.b16 %v1009, %v1008
        %v1019 = vpack.c.b16 %v1011, %v1010
        %1028 = vmatprep.subr.bf16.mxu0 0
        %1029 = vmatpush1.bf16.msra.mxu0 %v1012
        %1030 = vmatprep.subr.bf16.mxu0 0
        %1031 = vmatpush1.bf16.msra.mxu0 %v1013
        %1032 = vmatprep.subr.bf16.mxu0 0
        %1033 = vmatpush1.bf16.msra.mxu0 %v1014
        %1034 = vmatprep.subr.bf16.mxu0 0
        %1035 = vmatpush1.bf16.msra.mxu0 %v1015
        %1036 = vmatprep.subr.bf16.mxu0 0
        %1037 = vmatpush1.bf16.msra.mxu0 %v1016
        %1038 = vmatprep.subr.bf16.mxu0 0
        %1039 = vmatpush1.bf16.msra.mxu0 %v1017
        %1040 = vmatprep.subr.bf16.mxu0 0
        %1041 = vmatpush1.bf16.msra.mxu0 %v1018
        %1042 = vmatprep.subr.bf16.mxu0 0
        %1043 = vmatpush1.bf16.msra.mxu0 %v1019
        %1044 = vmatprep.subr.bf16.mxu0 0
        %1045 = vmatpush1.bf16.msra.mxu0 0
        %1046 = vmatprep.subr.bf16.mxu0 0
        %1047 = vmatpush1.bf16.msra.mxu0 0
        %1048 = vmatprep.subr.bf16.mxu0 0
        %1049 = vmatpush1.bf16.msra.mxu0 0
        %1050 = vmatprep.subr.bf16.mxu0 0
        %1051 = vmatpush1.bf16.msra.mxu0 0
        %1052 = vmatprep.subr.bf16.mxu0 0
        %1053 = vmatpush1.bf16.msra.mxu0 0
        %1054 = vmatprep.subr.bf16.mxu0 0
        %1055 = vmatpush1.bf16.msra.mxu0 0
        %1056 = vmatprep.subr.bf16.mxu0 0
        %1057 = vmatpush1.bf16.msra.mxu0 0
        %1058 = vmatprep.subr.bf16.mxu0 0
        %1059 = vmatpush1.bf16.msra.mxu0 0
        %1060 = vmatprep.mubr.bf16.mxu0 0
        %1061 = vmatmul.mubr.bf16.gmra.mrb[0].mxu0 %v956
        %v1062 = vpop.f32.mrb[0].mxu0
        %v1063 = vadd.f32 %v978, %v1062
        %v1064 = vpop.f32.mrb[0].mxu0
        %v1065 = vpop.f32.mrb[0].mxu0
        %v1066 = vpop.f32.mrb[0].mxu0
        %1067 = vdwg.mxu0
        %1068 = vst [vmem:[%s331] sm:$0xff] %v1063
      $region52: #{rnn_forward.1} parent=43 // pred_fallthru
        _
      %p1069 = scmp.lt.s32.totalorder %s23, 0
      %s1070 = scalar_select %p1069, %s23, 0
      %s1071 = smul.addr %s1070, 8
      %s1072 = scalar_lea.vmem %s6, %s1071
      %p1073 = scmp.lt.s32.totalorder %s23, 0
      %s1074 = scalar_select %p1073, %s23, 0
      %s1075 = smul.addr %s1074, 8
      %s1076 = scalar_lea.vmem %s7, %s1075
      // Predicated region
      $region53: #{rnn_forward.1} parent=43 // pred_check
        %p1077 = pneg %p187
      $region54: #{rnn_forward.1} parent=43 // pred_check_branch
        %1079 = sbr.rel (%p1077) target = $region56
      $region55: #{rnn_forward.1} parent=43 // pred_region
        _
      $region56: #{rnn_forward.1} parent=43 // pred_fallthru
        _
      // Predicated region
      $region57: #{rnn_forward.1} parent=43 // pred_check
        %p1080 = pneg %p213
      $region58: #{rnn_forward.1} parent=43 // pred_check_branch
        %1082 = sbr.rel (%p1080) target = $region60
      $region59: #{rnn_forward.1} parent=43 // pred_region
        _
      $region60: #{rnn_forward.1} parent=43 // pred_fallthru
        _
      // Predicated region
      $region61: #{rnn_forward.1} parent=43 // pred_check
        %p1083 = pneg %p187
      $region62: #{rnn_forward.1} parent=43 // pred_check_branch
        %1085 = sbr.rel (%p1083) target = $region64
      $region63: #{rnn_forward.1} parent=43 // pred_region
        %p1086 = scmp.lt.s32.totalorder %s23, 0
        %s1087 = scalar_select %p1086, %s23, 0
        %s1088 = smul.addr %s1087, 8
        %s1089 = scalar_lea.vmem %s6, %s1088
      $region64: #{rnn_forward.1} parent=43 // pred_fallthru
        _
      // Predicated region
      $region65: #{rnn_forward.1} parent=43 // pred_check
        %p1090 = pneg %p213
      $region66: #{rnn_forward.1} parent=43 // pred_check_branch
        %1092 = sbr.rel (%p1090) target = $region68
      $region67: #{rnn_forward.1} parent=43 // pred_region
        %p1093 = scmp.lt.s32.totalorder %s23, 0
        %s1094 = scalar_select %p1093, %s23, 0
        %s1095 = smul.addr %s1094, 8
        %s1096 = scalar_lea.vmem %s7, %s1095
      $region68: #{rnn_forward.1} parent=43 // pred_fallthru
        _
    $region44: #{rnn_forward.1} parent=5 // pred_fallthru
      _
    %p1097 = scmp.le.s32.totalorder 2, %s14
    // Predicated region
    $region69: #{rnn_forward.1} parent=5 // pred_check
      %p1098 = pneg %p1097
    $region70: #{rnn_forward.1} parent=5 // pred_check_branch
      %1100 = sbr.rel (%p1098) target = $region72
    $region71: #{rnn_forward.1} parent=5 // pred_region
      %s1101 = ssub.s32 %s14, 2
    $region72: #{rnn_forward.1} parent=5 // pred_fallthru
      _
  $region6: #{rnn_forward.1} parent=0 // loop_footer
    %s18 = sadd.s32 1, %s14
  $region7: #{rnn_forward.1} parent=0 // loop_footer_branch
    %13 = sbr.rel target = $region3
  $region8: #{rnn_forward.1} parent=0 // loop_exit
    _

</llo_original>
